<compile_context>
chip_gen: v5e
topology: v5e:2x2
jax: 0.10.0
libtpu: 0.0.40
codegen_flags: <defaults>
</compile_context>

<pallas_src>
import functools

import jax
import jax.numpy as jnp
from jax.experimental import pallas as pl
from jax.experimental.pallas import tpu as pltpu

LANE = 128      # vreg lane width
SUBLANE = 8     # vreg sublane width
TILE_CAP = 2048  # max batch-tile rows (working set stays ~3 MiB << VMEM)


def _round_up(x, m):
    return (x + m - 1) // m * m


# ---------------------------------------------------------------------------
# Kernel
# ---------------------------------------------------------------------------
def _make_policy_kernel(num_layers: int, obs_feat: int, width: int, action_dim: int):
    """Fused MLP kernel: num_layers x [Linear+Tanh] then a final Linear.

    obs_ref    : (TILE_B, obs_feat)           obs tile (feature dim 8-aligned)
    params_ref : (rows, width)                packed, lane-padded parameters
    mu_ref     : (TILE_B, action_dim)         compact mu output block
    """

    def kernel(obs_ref, params_ref, mu_ref):
        row = 0
        h = obs_ref[...]

        # First hidden layer: (B, obs_feat) @ (obs_feat, width).
        # obs_feat is a multiple of 8, so this slice is sublane-aligned.
        w = params_ref[row:row + obs_feat, :]
        row += obs_feat
        b = params_ref[row:row + 1, :]
        row += SUBLANE
        h = jnp.tanh(jnp.dot(h, w, preferred_element_type=jnp.float32) + b)

        # Remaining hidden layers: (B, width) @ (width, width).
        # Zero-padded weight rows / bias lanes keep padded columns of h
        # exactly zero through tanh.
        for _ in range(num_layers - 1):
            w = params_ref[row:row + width, :]
            row += width
            b = params_ref[row:row + 1, :]
            row += SUBLANE
            h = jnp.tanh(jnp.dot(h, w, preferred_element_type=jnp.float32) + b)

        # Output layer: full-width matmul on the MXU, then store only the
        # true action_dim lanes (masked store; trivial cost, big HBM saving).
        w = params_ref[row:row + width, :]
        row += width
        b = params_ref[row:row + 1, :]
        out = jnp.dot(h, w, preferred_element_type=jnp.float32) + b
        mu_ref[...] = out[:, :action_dim]

    return kernel


# ---------------------------------------------------------------------------
# Parameter init + packing
# ---------------------------------------------------------------------------
def init_gaussian_policy_params(key, obs_dim, action_dim, hid_size, num_layers):
    """Deterministic init mirroring the PyTorch module's shapes.
    Weights stored as (in_features, out_features)."""
    params = {"hidden": [], "log_std": jnp.zeros((action_dim,), jnp.float32)}
    current = obs_dim
    for _ in range(num_layers):
        key, kw, kb = jax.random.split(key, 3)
        bound = 1.0 / jnp.sqrt(current)
        w = jax.random.uniform(kw, (current, hid_size), jnp.float32, -bound, bound)
        b = jax.random.uniform(kb, (1, hid_size), jnp.float32, -bound, bound)
        params["hidden"].append((w, b))
        current = hid_size
    key, kw, kb = jax.random.split(key, 3)
    bound = 1.0 / jnp.sqrt(current)
    params["w_out"] = jax.random.uniform(
        kw, (current, action_dim), jnp.float32, -bound, bound
    )
    params["b_out"] = jax.random.uniform(
        kb, (1, action_dim), jnp.float32, -bound, bound
    )
    return params


def _pad2d(x, rows, cols):
    r, c = x.shape
    return jnp.pad(x, ((0, rows - r), (0, cols - c)))


def pack_gaussian_policy_params(params):
    """Packs all Linear params into one lane-padded (rows, width) f32 buffer
    and precomputes std = exp(log_std) (obs-independent, hoisted here)."""
    hid_size = params["hidden"][0][0].shape[1]
    obs_dim = params["hidden"][0][0].shape[0]
    action_dim = params["w_out"].shape[1]
    width = max(_round_up(hid_size, LANE), _round_up(action_dim, LANE))
    w1_rows = _round_up(obs_dim, SUBLANE)

    segs = []
    for li, (w, b) in enumerate(params["hidden"]):
        w_rows = w1_rows if li == 0 else width
        segs.append(_pad2d(w, w_rows, width))
        segs.append(_pad2d(b, SUBLANE, width))
    segs.append(_pad2d(params["w_out"], width, width))
    segs.append(_pad2d(params["b_out"], SUBLANE, width))
    packed = jnp.concatenate(segs, axis=0)

    std = jnp.exp(params["log_std"])
    return packed, std


# ---------------------------------------------------------------------------
# Forward wrapper
# ---------------------------------------------------------------------------
def _choose_tile_b(batch):
    tile = _round_up(batch, SUBLANE)
    if batch >= 2 * SUBLANE:
        # Guarantee >= 2 grid steps so the "parallel" batch axis can shard
        # across both TensorCores on v7x (negligible cost on v5e/v6e).
        tile = min(tile, _round_up(pl.cdiv(batch, 2), SUBLANE))
    return min(tile, TILE_CAP)


@functools.partial(jax.jit, static_argnames=("num_layers",))
def gaussian_policy_forward(obs, packed_params, std, *, num_layers):
    """Matches GaussianPolicy_11.forward:
    returns (mu (batch, action_dim), std (action_dim,))."""
    batch, obs_dim = obs.shape
    rows, width = packed_params.shape
    action_dim = std.shape[0]

    # Keep the first-layer weight slice 8-aligned: pad obs' feature dim to a
    # multiple of 8 only when necessary (no-op for obs_dim % 8 == 0).
    obs_feat = _round_up(obs_dim, SUBLANE)
    if obs_feat != obs_dim:
        obs = jnp.pad(obs, ((0, 0), (0, obs_feat - obs_dim)))

    tile_b = _choose_tile_b(batch)
    grid = (pl.cdiv(batch, tile_b),)

    kernel = _make_policy_kernel(num_layers, obs_feat, width, action_dim)

    flops = 2 * batch * (
        obs_feat * width + (num_layers - 1) * width * width + width * width
    )
    transcendentals = num_layers * batch * width
    bytes_accessed = 4 * (batch * obs_feat + rows * width + batch * action_dim)

    mu = pl.pallas_call(
        kernel,
        out_shape=jax.ShapeDtypeStruct((batch, action_dim), jnp.float32),
        grid=grid,
        in_specs=[
            pl.BlockSpec((tile_b, obs_feat), lambda i: (i, 0)),
            # Constant index_map -> packed weights stay VMEM-resident.
            pl.BlockSpec((rows, width), lambda i: (0, 0)),
        ],
        out_specs=pl.BlockSpec((tile_b, action_dim), lambda i: (i, 0)),
        compiler_params=pltpu.CompilerParams(
            dimension_semantics=("parallel",),
        ),
        cost_estimate=pl.CostEstimate(
            flops=flops,
            transcendentals=transcendentals,
            bytes_accessed=bytes_accessed,
        ),
    )(obs, packed_params)

    return mu, std


# ---------------------------------------------------------------------------
# Pure-JAX reference
# ---------------------------------------------------------------------------
def _reference_forward(obs, params):
    h = obs
    for w, b in params["hidden"]:
        h = jnp.tanh(h @ w + b)
    mu = h @ params["w_out"] + params["b_out"]
    std = jnp.exp(params["log_std"])
    return mu, std


if __name__ == "__main__":
    batch, obs_dim, action_dim, hid_size, num_layers = 8, 16, 4, 32, 2

    key = jax.random.PRNGKey(0)
    key, k_obs, k_params = jax.random.split(key, 3)

    obs = jax.random.normal(k_obs, (batch, obs_dim), jnp.float32)
    params = init_gaussian_policy_params(
        k_params, obs_dim, action_dim, hid_size, num_layers
    )
    packed_params, std_cached = pack_gaussian_policy_params(params)

    mu, std = gaussian_policy_forward(
        obs, packed_params, std_cached, num_layers=num_layers
    )
    jax.block_until_ready((mu, std))

    mu_ref, std_ref = _reference_forward(obs, params)
    assert mu.shape == (batch, action_dim)
    assert std.shape == (action_dim,)
    assert jnp.allclose(mu, mu_ref, atol=1e-5, rtol=1e-5)
    assert jnp.allclose(std, std_ref, atol=1e-6, rtol=1e-6)

    print("KERNEL_OK")
</pallas_src>

<mosaic_0001>
module attributes {stable_mosaic.version = 11 : i64} {
  func.func @kernel(%arg0: i32, %arg1: memref<8x16xf32, #tpu.memory_space<vmem>>, %arg2: memref<296x128xf32, #tpu.memory_space<vmem>>, %arg3: memref<8x4xf32, #tpu.memory_space<vmem>>) attributes {dimension_semantics = [#tpu.dimension_semantics<parallel>], iteration_bounds = array<i64: 1>, scalar_prefetch = 0 : i64, scratch_operands = 0 : i64, tpu.core_type = #tpu.core_type<tc>, window_params = [{transform_indices = @transform_0, window_bounds = array<i64: 8, 16>}, {pipeline_mode = #tpu.pipeline_mode<synchronous>, transform_indices = @transform_1, window_bounds = array<i64: 296, 128>}, {transform_indices = @transform_2, window_bounds = array<i64: 8, 4>}]} {
    %c0 = arith.constant 0 : index
    %c0_0 = arith.constant 0 : index
    %0 = vector.load %arg1[%c0, %c0_0] : memref<8x16xf32, #tpu.memory_space<vmem>>, vector<8x16xf32>
    %c0_1 = arith.constant 0 : index
    %c0_2 = arith.constant 0 : index
    %1 = vector.load %arg2[%c0_1, %c0_2] : memref<296x128xf32, #tpu.memory_space<vmem>>, vector<16x128xf32>
    %c16 = arith.constant 16 : index
    %c0_3 = arith.constant 0 : index
    %2 = vector.load %arg2[%c16, %c0_3] : memref<296x128xf32, #tpu.memory_space<vmem>>, vector<1x128xf32>
    %cst = arith.constant dense<0.000000e+00> : vector<8x128xf32>
    %3 = tpu.matmul %0, %1, %cst {dimension_numbers = #tpu.dot_dimension_numbers<[1], [0], [0], [1], [0, 0, 1, 1], [], []>} : vector<8x16xf32>, vector<16x128xf32>, vector<8x128xf32> -> vector<8x128xf32>
    %4 = vector.broadcast %2 : vector<1x128xf32> to vector<8x128xf32>
    %5 = arith.addf %3, %4 : vector<8x128xf32>
    %6 = math.tanh %5 : vector<8x128xf32>
    %c24 = arith.constant 24 : index
    %c0_4 = arith.constant 0 : index
    %7 = vector.load %arg2[%c24, %c0_4] : memref<296x128xf32, #tpu.memory_space<vmem>>, vector<128x128xf32>
    %c152 = arith.constant 152 : index
    %c0_5 = arith.constant 0 : index
    %8 = vector.load %arg2[%c152, %c0_5] : memref<296x128xf32, #tpu.memory_space<vmem>>, vector<1x128xf32>
    %cst_6 = arith.constant dense<0.000000e+00> : vector<8x128xf32>
    %9 = tpu.matmul %6, %7, %cst_6 {dimension_numbers = #tpu.dot_dimension_numbers<[1], [0], [0], [1], [0, 0, 1, 1], [], []>} : vector<8x128xf32>, vector<128x128xf32>, vector<8x128xf32> -> vector<8x128xf32>
    %10 = vector.broadcast %8 : vector<1x128xf32> to vector<8x128xf32>
    %11 = arith.addf %9, %10 : vector<8x128xf32>
    %12 = math.tanh %11 : vector<8x128xf32>
    %c160 = arith.constant 160 : index
    %c0_7 = arith.constant 0 : index
    %13 = vector.load %arg2[%c160, %c0_7] : memref<296x128xf32, #tpu.memory_space<vmem>>, vector<128x128xf32>
    %c288 = arith.constant 288 : index
    %c0_8 = arith.constant 0 : index
    %14 = vector.load %arg2[%c288, %c0_8] : memref<296x128xf32, #tpu.memory_space<vmem>>, vector<1x128xf32>
    %cst_9 = arith.constant dense<0.000000e+00> : vector<8x128xf32>
    %15 = tpu.matmul %12, %13, %cst_9 {dimension_numbers = #tpu.dot_dimension_numbers<[1], [0], [0], [1], [0, 0, 1, 1], [], []>} : vector<8x128xf32>, vector<128x128xf32>, vector<8x128xf32> -> vector<8x128xf32>
    %16 = vector.broadcast %14 : vector<1x128xf32> to vector<8x128xf32>
    %17 = arith.addf %15, %16 : vector<8x128xf32>
    %18 = vector.extract_strided_slice %17 {offsets = [0, 0], sizes = [8, 4], strides = [1, 1]} : vector<8x128xf32> to vector<8x4xf32>
    %c0_10 = arith.constant 0 : index
    %c0_11 = arith.constant 0 : index
    %19 = vector.load %arg3[%c0_10, %c0_11] : memref<8x4xf32, #tpu.memory_space<vmem>>, vector<8x4xf32>
    tpu.vector_store %arg3[%c0_10, %c0_11], %18 {strides = array<i32>} : memref<8x4xf32, #tpu.memory_space<vmem>>, vector<8x4xf32>,
    return
  }
  func.func @transform_0(%arg0: i32) -> (i32, i32) {
    %c0_i32 = arith.constant 0 : i32
    %c0_i32_0 = arith.constant 0 : i32
    return %arg0, %c0_i32 : i32, i32
  }
  func.func @transform_1(%arg0: i32) -> (i32, i32) {
    %c0_i32 = arith.constant 0 : i32
    %c0_i32_0 = arith.constant 0 : i32
    %c0_i32_1 = arith.constant 0 : i32
    return %c0_i32, %c0_i32_0 : i32, i32
  }
  func.func @transform_2(%arg0: i32) -> (i32, i32) {
    %c0_i32 = arith.constant 0 : i32
    %c0_i32_0 = arith.constant 0 : i32
    return %arg0, %c0_i32 : i32, i32
  }
}

</mosaic_0001>

<llo_original>
// kernel: gaussian_policy_forward.1
$region0: #{gaussian_policy_forward.1}
  #allocation0 [shape = 'u32[]', space=smem, size = 0x4, offset = 0x4, fixed_abs, tag = 'smem constant byte address 0x4 - core index']
  #allocation1 [shape = 'u32[72,128]{1,0:T(1,128)}', space=vmem, size = 0x9000, scoped, tag = 'internal scratch']
  %s0 = inlined_call_operand.hbm [shape: f32[8,16], index: 0, kind: input, shape index: {}]
  %s1 = inlined_call_operand.hbm [shape: f32[296,128], index: 1, kind: input, shape index: {}]
  %s2 = inlined_call_operand.vmem [shape: f32[8,4], index: 2, kind: output, shape index: {}]
  %s3 = sld [smem:[#allocation0]]
  $region26: #{gaussian_policy_forward.1} parent=0
    _
  %s5 = ssub.s32 1, %s3
  %s6 = scalar_select 0, %s5, %s3
  $region1: #{gaussian_policy_forward.1} parent=0
    #allocation2 [shape = 'u8[4096]{0}', space=vmem, size = 0x1000, scoped, tag = 'input window, operand 0, single buffered']
    #allocation3 [shape = 's32[1]{0}', space=sflag, size = 0x4, scoped, tag = 'scoped memory for gaussian_policy_forward.1']
    #allocation4 [shape = 'u8[151552]{0}', space=vmem, size = 0x25000, scoped, tag = 'input window, operand 1, single buffered']
    #allocation5 [shape = 's32[1]{0}', space=sflag, size = 0x4, scoped, tag = 'scoped memory for gaussian_policy_forward.1']
    %7 = vsyncpa [#allocation3], 0
    %8 = vsyncpa [#allocation5], 0
    // Predicated region
    $region2: #{gaussian_policy_forward.1} parent=1 // pred_check
      _
    $region3: #{gaussian_policy_forward.1} parent=1 // pred_check_branch
      %10 = sbr.rel (0) target = $region5
    $region4: #{gaussian_policy_forward.1} parent=1 // pred_region
      %12 = vsyncadd [#allocation3], 0
      %s14 = sshll.u32 %s0, 4
      %s15 = int_to_ptr.hbm [resolvable:$true] %s14
      %s16 = sshll.u32 [#allocation2], 4
      %s17 = int_to_ptr.vmem [resolvable:$true] %s16
      %19 = dma.hbm_to_vmem [thread:$0]  %s15, 128, %s17, [#allocation3]
    $region5: #{gaussian_policy_forward.1} parent=1 // pred_fallthru
      _
    // Predicated region
    $region6: #{gaussian_policy_forward.1} parent=1 // pred_check
      _
    $region7: #{gaussian_policy_forward.1} parent=1 // pred_check_branch
      %21 = sbr.rel (0) target = $region9
    $region8: #{gaussian_policy_forward.1} parent=1 // pred_region
      %23 = vsyncadd [#allocation5], 0
      %s24 = sshll.u32 %s1, 4
      %s25 = int_to_ptr.hbm [resolvable:$true] %s24
      %s26 = sshll.u32 [#allocation4], 4
      %s27 = int_to_ptr.vmem [resolvable:$true] %s26
      %32 = dma.hbm_to_vmem [thread:$0]  %s25, 4736, %s27, [#allocation5], 128, 128, 8
    $region9: #{gaussian_policy_forward.1} parent=1 // pred_fallthru
      _
    // Predicated region
    $region10: #{gaussian_policy_forward.1} parent=1 // pred_check
      _
    $region11: #{gaussian_policy_forward.1} parent=1 // pred_check_branch
      %34 = sbr.rel (0) target = $region13
    $region12: #{gaussian_policy_forward.1} parent=1 // pred_region
      %36 = dma.done [#allocation3], 128
    $region13: #{gaussian_policy_forward.1} parent=1 // pred_fallthru
      _
    // Predicated region
    $region14: #{gaussian_policy_forward.1} parent=1 // pred_check
      _
    $region15: #{gaussian_policy_forward.1} parent=1 // pred_check_branch
      %38 = sbr.rel (0) target = $region17
    $region16: #{gaussian_policy_forward.1} parent=1 // pred_region
      %40 = dma.done [#allocation5], 4736
    $region17: #{gaussian_policy_forward.1} parent=1 // pred_fallthru
      _
    %v41 = vld [vmem:[#allocation2] sm:$0xff]
    %v42 = vld [vmem:[#allocation4] sm:$0xff]
    %v43 = vld [vmem:[#allocation4 + $0x8] sm:$0xff]
    %v44 = vld [vmem:[#allocation4 + $0x10] sm:$0x1]
    %v45 = vperm.slane %v44, 0
    %vm46 = vcmask 130048
    %v48 = vsel %vm46, %v41, 0
    %50 = vmatpush.msra.mxu0 0.0
    %51 = vmatpush.msra.mxu0 0.0
    %52 = vmatpush.msra.mxu0 0.0
    %53 = vmatpush.msra.mxu0 0.0
    %54 = vmatpush.msra.mxu0 0.0
    %55 = vmatpush.msra.mxu0 0.0
    %56 = vmatpush.msra.mxu0 0.0
    %57 = vmatpush.msra.mxu0 0.0
    %58 = vmatpush.msra.mxu0 0.0
    %59 = vmatpush.msra.mxu0 0.0
    %60 = vmatpush.msra.mxu0 0.0
    %61 = vmatpush.msra.mxu0 0.0
    %62 = vmatpush.msra.mxu0 0.0
    %63 = vmatpush.msra.mxu0 0.0
    %64 = vmatpush.msra.mxu0 %v43
    %65 = vmatpush.msra.mxu0 %v42
    %66 = vmatmul.f32.gmra.mxu0 %v48
    %v67 = vpop.f32.mrf.mxu0
    %v68 = vadd.f32 %v45, %v67
    %69 = vdwg.mxu0
    %v70 = vtanh.pop %v68
    %v71 = vld [vmem:[#allocation4 + $0x18] sm:$0xff]
    %v72 = vld [vmem:[#allocation4 + $0x20] sm:$0xff]
    %v73 = vld [vmem:[#allocation4 + $0x28] sm:$0xff]
    %v74 = vld [vmem:[#allocation4 + $0x30] sm:$0xff]
    %v75 = vld [vmem:[#allocation4 + $0x38] sm:$0xff]
    %v76 = vld [vmem:[#allocation4 + $0x40] sm:$0xff]
    %v77 = vld [vmem:[#allocation4 + $0x48] sm:$0xff]
    %v78 = vld [vmem:[#allocation4 + $0x50] sm:$0xff]
    %v79 = vld [vmem:[#allocation4 + $0x58] sm:$0xff]
    %v80 = vld [vmem:[#allocation4 + $0x60] sm:$0xff]
    %v81 = vld [vmem:[#allocation4 + $0x68] sm:$0xff]
    %v82 = vld [vmem:[#allocation4 + $0x70] sm:$0xff]
    %v83 = vld [vmem:[#allocation4 + $0x78] sm:$0xff]
    %v84 = vld [vmem:[#allocation4 + $0x80] sm:$0xff]
    %v85 = vld [vmem:[#allocation4 + $0x88] sm:$0xff]
    %v86 = vld [vmem:[#allocation4 + $0x90] sm:$0xff]
    %v87 = vld [vmem:[#allocation4 + $0x98] sm:$0x1]
    %v88 = vperm.slane %v87, 0
    %89 = vmatpush.msra.mxu0 %v86
    %90 = vmatpush.msra.mxu0 %v85
    %91 = vmatpush.msra.mxu0 %v84
    %92 = vmatpush.msra.mxu0 %v83
    %93 = vmatpush.msra.mxu0 %v82
    %94 = vmatpush.msra.mxu0 %v81
    %95 = vmatpush.msra.mxu0 %v80
    %96 = vmatpush.msra.mxu0 %v79
    %97 = vmatpush.msra.mxu0 %v78
    %98 = vmatpush.msra.mxu0 %v77
    %99 = vmatpush.msra.mxu0 %v76
    %100 = vmatpush.msra.mxu0 %v75
    %101 = vmatpush.msra.mxu0 %v74
    %102 = vmatpush.msra.mxu0 %v73
    %103 = vmatpush.msra.mxu0 %v72
    %104 = vmatpush.msra.mxu0 %v71
    %105 = vmatmul.f32.gmra.mxu0 %v70
    %v106 = vpop.f32.mrf.mxu0
    %v107 = vadd.f32 %v88, %v106
    %108 = vdwg.mxu0
    %v109 = vtanh.pop %v107
    %v110 = vld [vmem:[#allocation4 + $0xa0] sm:$0xff]
    %v111 = vld [vmem:[#allocation4 + $0xa8] sm:$0xff]
    %v112 = vld [vmem:[#allocation4 + $0xb0] sm:$0xff]
    %v113 = vld [vmem:[#allocation4 + $0xb8] sm:$0xff]
    %v114 = vld [vmem:[#allocation4 + $0xc0] sm:$0xff]
    %v115 = vld [vmem:[#allocation4 + $0xc8] sm:$0xff]
    %v116 = vld [vmem:[#allocation4 + $0xd0] sm:$0xff]
    %v117 = vld [vmem:[#allocation4 + $0xd8] sm:$0xff]
    %v118 = vld [vmem:[#allocation4 + $0xe0] sm:$0xff]
    %v119 = vld [vmem:[#allocation4 + $0xe8] sm:$0xff]
    %v120 = vld [vmem:[#allocation4 + $0xf0] sm:$0xff]
    %v121 = vld [vmem:[#allocation4 + $0xf8] sm:$0xff]
    %v122 = vld [vmem:[#allocation4 + $0x100] sm:$0xff]
    %v123 = vld [vmem:[#allocation4 + $0x108] sm:$0xff]
    %v124 = vld [vmem:[#allocation4 + $0x110] sm:$0xff]
    %v125 = vld [vmem:[#allocation4 + $0x118] sm:$0xff]
    %v126 = vld [vmem:[#allocation4 + $0x120] sm:$0x1]
    %v127 = vperm.slane %v126, 0
    %128 = vmatpush.msra.mxu0 %v125
    %129 = vmatpush.msra.mxu0 %v124
    %130 = vmatpush.msra.mxu0 %v123
    %131 = vmatpush.msra.mxu0 %v122
    %132 = vmatpush.msra.mxu0 %v121
    %133 = vmatpush.msra.mxu0 %v120
    %134 = vmatpush.msra.mxu0 %v119
    %135 = vmatpush.msra.mxu0 %v118
    %136 = vmatpush.msra.mxu0 %v117
    %137 = vmatpush.msra.mxu0 %v116
    %138 = vmatpush.msra.mxu0 %v115
    %139 = vmatpush.msra.mxu0 %v114
    %140 = vmatpush.msra.mxu0 %v113
    %141 = vmatpush.msra.mxu0 %v112
    %142 = vmatpush.msra.mxu0 %v111
    %143 = vmatpush.msra.mxu0 %v110
    %144 = vmatmul.f32.gmra.mxu0 %v109
    %v145 = vpop.f32.mrf.mxu0
    %v146 = vadd.f32 %v127, %v145
    %147 = vdwg.mxu0
    %vm148 = vcmask 31744
    %149 = vst.msk [vmem:[%s2] sm:$0xff] %vm148, %v146
    // Predicated region
    $region18: #{gaussian_policy_forward.1} parent=1 // pred_check
      _
    $region19: #{gaussian_policy_forward.1} parent=1 // pred_check_branch
      %151 = sbr.rel (0) target = $region21
    $region20: #{gaussian_policy_forward.1} parent=1 // pred_region
      _
    $region21: #{gaussian_policy_forward.1} parent=1 // pred_fallthru
      _
    // Predicated region
    $region22: #{gaussian_policy_forward.1} parent=1 // pred_check
      _
    $region23: #{gaussian_policy_forward.1} parent=1 // pred_check_branch
      %153 = sbr.rel (0) target = $region25
    $region24: #{gaussian_policy_forward.1} parent=1 // pred_region
      _
    $region25: #{gaussian_policy_forward.1} parent=1 // pred_fallthru
      _
    %154 = vsyncpa [#allocation3], 1
    %155 = vsyncpa [#allocation5], 1

</llo_original>
